<compile_context>
chip_gen: v5e
topology: v5e:2x2
jax: 0.10.0
libtpu: 0.0.40
codegen_flags: <defaults>
</compile_context>

<pallas_src>
import functools

import jax
import jax.numpy as jnp
from jax.experimental import pallas as pl
from jax.experimental.pallas import tpu as pltpu

NUM_CLASSES = 11      # logits channel dim (classes 0..10)
IGNORE_INDEX = 10
GAMMA = 1.0
LANES = 128           # positions per vreg row (lane axis)
MAX_ROWS = 512        # sublane-rows per grid step -> 512*128 = 64K positions (~2.9 MiB f32 logits @ C=11)


def _focal_ce_kernel(logits_ref, tgt_ref, out_ref, acc_ref, *,
                     gamma, ignore_index, num_classes):
    j = pl.program_id(2)                      # position-tile index (reduction axis)

    @pl.when(j == 0)
    def _():
        acc_ref[...] = jnp.zeros_like(acc_ref)

    # (C, R, L): classes on the leading axis; positions dense on (sublane, lane).
    x = logits_ref[0].astype(jnp.float32)     # upcast in-register (no wrapper f32 HBM copy)
    t = tgt_ref[0, 0]                         # (R, L) int32

    # log-softmax over the class axis: C-1 dense VPU maxes, then one fused pass of
    # subtract/exp/add plus compile-time-unrolled selects for the target gather
    # (no broadcasted_iota, no XLU work).
    m = x[0]
    for c in range(1, num_classes):
        m = jnp.maximum(m, x[c])

    sum_e = jnp.zeros_like(m)
    xm_t = jnp.zeros_like(m)                  # gathered shifted target logit (x_t - m)
    for c in range(num_classes):
        xmc = x[c] - m
        sum_e = sum_e + jnp.exp(xmc)
        if c != ignore_index:
            xm_t = jnp.where(t == c, xmc, xm_t)

    ce = jnp.log(sum_e) - xm_t                # (R, L)
    # ignore_index: zero loss at those positions, but they still count in the mean
    # (matches torch: reduction='none' CE returns 0 there; focal .mean() divides by all).
    ce = jnp.where(t == ignore_index, 0.0, ce)

    # focal re-weighting, specialized for compile-time gamma (avoids pow -> exp/log).
    # NOTE: 1 - exp(-ce) loses a little precision for tiny ce; matches the torch forward.
    one_m_p = 1.0 - jnp.exp(-ce)
    if gamma == 1.0:
        w = one_m_p
    elif gamma == 2.0:
        w = one_m_p * one_m_p
    else:
        w = one_m_p ** gamma
    acc_ref[...] += w * ce                    # dense (R, L) accumulator; *10/P hoisted to wrapper

    # Single cross-lane reduce per (half, batch-row), in the epilogue only.
    @pl.when(j == pl.num_programs(2) - 1)
    def _():
        out_ref[...] = jnp.sum(acc_ref[...]).reshape(1, 1, 1, 1)


def _in_index_map(tiles_per_half):
    def index_map(h, n, j):
        return (n, 0, h * tiles_per_half + j, 0)
    return index_map


def focal_loss_pallas(logits_nchw, target_nhw, *, gamma=GAMMA, ignore_index=IGNORE_INDEX):
    # TODO(synk): `weight` and `label_smoothing` of F.cross_entropy are not implemented
    # (module defaults are weight=None, label_smoothing=0.0, which this matches).
    N, C, H, W = logits_nchw.shape
    HW = H * W
    P = N * HW                                 # mean denominator (ignored positions still count)

    # Plan the position layout: (rows, 128), rows_block sublane-rows per grid step.
    rows_needed = pl.cdiv(HW, LANES)
    if rows_needed <= MAX_ROWS:
        rows_block = rows_needed               # full extent of that axis (always legal)
    else:
        rows_block = MAX_ROWS                  # multiple of 8
    rows_padded = pl.cdiv(rows_needed, rows_block) * rows_block
    hw_padded = rows_padded * LANES

    x = logits_nchw                            # keep native dtype; upcast inside the kernel
    t = target_nhw.astype(jnp.int32)
    if hw_padded != HW:
        # Tail handling: pad positions with ignore_index targets -> exactly-zero contribution.
        x = jnp.pad(x.reshape(N, C, HW), ((0, 0), (0, 0), (0, hw_padded - HW)))
        t = jnp.pad(t.reshape(N, HW), ((0, 0), (0, hw_padded - HW)),
                    constant_values=ignore_index)
    x = x.reshape(N, C, rows_padded, LANES)    # free metadata reshape when already aligned
    t = t.reshape(N, 1, rows_padded, LANES)

    num_tiles = rows_padded // rows_block
    if num_tiles % 2 == 0 and num_tiles >= 2:
        halves, tiles_per_half = 2, num_tiles // 2   # gives v7x megacore work even at N == 1
    else:
        halves, tiles_per_half = 1, num_tiles

    kernel = functools.partial(_focal_ce_kernel, gamma=gamma,
                               ignore_index=ignore_index, num_classes=C)
    in_map = _in_index_map(tiles_per_half)

    partials = pl.pallas_call(
        kernel,
        out_shape=jax.ShapeDtypeStruct((halves, N, 1, 1), jnp.float32),
        grid_spec=pltpu.PrefetchScalarGridSpec(
            num_scalar_prefetch=0,
            grid=(halves, N, tiles_per_half),
            in_specs=[
                pl.BlockSpec((1, C, rows_block, LANES), in_map),
                pl.BlockSpec((1, 1, rows_block, LANES), in_map),
            ],
            out_specs=pl.BlockSpec((1, 1, 1, 1), lambda h, n, j: (h, n, 0, 0)),
            scratch_shapes=[pltpu.VMEM((rows_block, LANES), jnp.float32)],
        ),
        compiler_params=pltpu.CompilerParams(
            dimension_semantics=("parallel", "parallel", "arbitrary"),
        ),
    )(x, t)
    return jnp.sum(partials) * (10.0 / float(P))


def focal_loss_ref(logits_nchw, target_nhw, *, gamma=GAMMA, ignore_index=IGNORE_INDEX):
    # Pure-JAX reference replicating torch semantics.
    N, C, H, W = logits_nchw.shape
    x = jnp.transpose(logits_nchw, (0, 2, 3, 1)).reshape(-1, C).astype(jnp.float32)
    t = target_nhw.reshape(-1).astype(jnp.int32)
    logp = jax.nn.log_softmax(x, axis=-1)
    ce = -jnp.take_along_axis(logp, t[:, None], axis=-1)[:, 0]
    ce = jnp.where(t == ignore_index, 0.0, ce)
    p = jnp.exp(-ce)
    return jnp.mean((1.0 - p) ** gamma * ce * 10.0)


if __name__ == "__main__":
    key = jax.random.PRNGKey(0)

    # Case 1: lane-aligned positions (HW % 128 == 0), batch of 2.
    k1, k2, k3, k4 = jax.random.split(key, 4)
    N, C, H, W = 2, NUM_CLASSES, 16, 16
    logits = jax.random.normal(k1, (N, C, H, W), dtype=jnp.float32)
    target = jax.random.randint(k2, (N, H, W), 0, NUM_CLASSES, dtype=jnp.int32)  # includes ignore_index=10
    loss = jax.block_until_ready(focal_loss_pallas(logits, target))
    ref = focal_loss_ref(logits, target)
    assert jnp.allclose(loss, ref, rtol=1e-5, atol=1e-5), (loss, ref)

    # Case 2: non-aligned positions (exercises the ignore_index-padded tail) with N == 1.
    N2, H2, W2 = 1, 20, 20
    logits2 = jax.random.normal(k3, (N2, C, H2, W2), dtype=jnp.float32)
    target2 = jax.random.randint(k4, (N2, H2, W2), 0, NUM_CLASSES, dtype=jnp.int32)
    loss2 = jax.block_until_ready(focal_loss_pallas(logits2, target2))
    ref2 = focal_loss_ref(logits2, target2)
    assert jnp.allclose(loss2, ref2, rtol=1e-5, atol=1e-5), (loss2, ref2)

    print("KERNEL_OK")
</pallas_src>

<mosaic_0001>
module attributes {stable_mosaic.version = 11 : i64} {
  func.func @_focal_ce_kernel(%arg0: i32, %arg1: i32, %arg2: i32, %arg3: memref<1x11x2x128xf32, #tpu.memory_space<vmem>>, %arg4: memref<1x1x2x128xi32, #tpu.memory_space<vmem>>, %arg5: memref<1x1x1x1xf32, #tpu.memory_space<vmem>>, %arg6: memref<2x128xf32, #tpu.memory_space<vmem>>) attributes {dimension_semantics = [#tpu.dimension_semantics<parallel>, #tpu.dimension_semantics<parallel>, #tpu.dimension_semantics<arbitrary>], iteration_bounds = array<i64: 1, 2, 1>, scalar_prefetch = 0 : i64, scratch_operands = 1 : i64, tpu.core_type = #tpu.core_type<tc>, window_params = [{transform_indices = @transform_0, window_bounds = array<i64: 1, 11, 2, 128>}, {transform_indices = @transform_1, window_bounds = array<i64: 1, 1, 2, 128>}, {transform_indices = @transform_2, window_bounds = array<i64: 1, 1, 1, 1>}]} {
    %c0_i32 = arith.constant 0 : i32
    %0 = arith.cmpi eq, %arg2, %c0_i32 : i32
    %1 = arith.extui %0 : i1 to i32
    %c0_i32_0 = arith.constant 0 : i32
    %2 = arith.cmpi ne, %1, %c0_i32_0 : i32
    scf.if %2 {
      %cst_19 = arith.constant 0.000000e+00 : f32
      %144 = vector.broadcast %cst_19 : f32 to vector<2x128xf32>
      %c0_20 = arith.constant 0 : index
      %c0_21 = arith.constant 0 : index
      %145 = vector.load %arg6[%c0_20, %c0_21] : memref<2x128xf32, #tpu.memory_space<vmem>>, vector<2x128xf32>
      tpu.vector_store %arg6[%c0_20, %c0_21], %144 {strides = array<i32>} : memref<2x128xf32, #tpu.memory_space<vmem>>, vector<2x128xf32>,
    } else {
    }
    %c0 = arith.constant 0 : index
    %c0_1 = arith.constant 0 : index
    %c0_2 = arith.constant 0 : index
    %c0_3 = arith.constant 0 : index
    %3 = vector.load %arg3[%c0, %c0_1, %c0_2, %c0_3] : memref<1x11x2x128xf32, #tpu.memory_space<vmem>>, vector<1x11x2x128xf32>
    %4 = vector.shape_cast %3 : vector<1x11x2x128xf32> to vector<11x2x128xf32>
    %c0_4 = arith.constant 0 : index
    %c0_5 = arith.constant 0 : index
    %c0_6 = arith.constant 0 : index
    %c0_7 = arith.constant 0 : index
    %5 = vector.load %arg4[%c0_4, %c0_5, %c0_6, %c0_7] : memref<1x1x2x128xi32, #tpu.memory_space<vmem>>, vector<1x1x2x128xi32>
    %6 = vector.shape_cast %5 : vector<1x1x2x128xi32> to vector<2x128xi32>
    %7 = vector.extract_strided_slice %4 {offsets = [0, 0, 0], sizes = [1, 2, 128], strides = [1, 1, 1]} : vector<11x2x128xf32> to vector<1x2x128xf32>
    %8 = vector.shape_cast %7 : vector<1x2x128xf32> to vector<2x128xf32>
    %9 = vector.extract_strided_slice %4 {offsets = [1, 0, 0], sizes = [1, 2, 128], strides = [1, 1, 1]} : vector<11x2x128xf32> to vector<1x2x128xf32>
    %10 = vector.shape_cast %9 : vector<1x2x128xf32> to vector<2x128xf32>
    %11 = arith.maximumf %8, %10 : vector<2x128xf32>
    %12 = vector.extract_strided_slice %4 {offsets = [2, 0, 0], sizes = [1, 2, 128], strides = [1, 1, 1]} : vector<11x2x128xf32> to vector<1x2x128xf32>
    %13 = vector.shape_cast %12 : vector<1x2x128xf32> to vector<2x128xf32>
    %14 = arith.maximumf %11, %13 : vector<2x128xf32>
    %15 = vector.extract_strided_slice %4 {offsets = [3, 0, 0], sizes = [1, 2, 128], strides = [1, 1, 1]} : vector<11x2x128xf32> to vector<1x2x128xf32>
    %16 = vector.shape_cast %15 : vector<1x2x128xf32> to vector<2x128xf32>
    %17 = arith.maximumf %14, %16 : vector<2x128xf32>
    %18 = vector.extract_strided_slice %4 {offsets = [4, 0, 0], sizes = [1, 2, 128], strides = [1, 1, 1]} : vector<11x2x128xf32> to vector<1x2x128xf32>
    %19 = vector.shape_cast %18 : vector<1x2x128xf32> to vector<2x128xf32>
    %20 = arith.maximumf %17, %19 : vector<2x128xf32>
    %21 = vector.extract_strided_slice %4 {offsets = [5, 0, 0], sizes = [1, 2, 128], strides = [1, 1, 1]} : vector<11x2x128xf32> to vector<1x2x128xf32>
    %22 = vector.shape_cast %21 : vector<1x2x128xf32> to vector<2x128xf32>
    %23 = arith.maximumf %20, %22 : vector<2x128xf32>
    %24 = vector.extract_strided_slice %4 {offsets = [6, 0, 0], sizes = [1, 2, 128], strides = [1, 1, 1]} : vector<11x2x128xf32> to vector<1x2x128xf32>
    %25 = vector.shape_cast %24 : vector<1x2x128xf32> to vector<2x128xf32>
    %26 = arith.maximumf %23, %25 : vector<2x128xf32>
    %27 = vector.extract_strided_slice %4 {offsets = [7, 0, 0], sizes = [1, 2, 128], strides = [1, 1, 1]} : vector<11x2x128xf32> to vector<1x2x128xf32>
    %28 = vector.shape_cast %27 : vector<1x2x128xf32> to vector<2x128xf32>
    %29 = arith.maximumf %26, %28 : vector<2x128xf32>
    %30 = vector.extract_strided_slice %4 {offsets = [8, 0, 0], sizes = [1, 2, 128], strides = [1, 1, 1]} : vector<11x2x128xf32> to vector<1x2x128xf32>
    %31 = vector.shape_cast %30 : vector<1x2x128xf32> to vector<2x128xf32>
    %32 = arith.maximumf %29, %31 : vector<2x128xf32>
    %33 = vector.extract_strided_slice %4 {offsets = [9, 0, 0], sizes = [1, 2, 128], strides = [1, 1, 1]} : vector<11x2x128xf32> to vector<1x2x128xf32>
    %34 = vector.shape_cast %33 : vector<1x2x128xf32> to vector<2x128xf32>
    %35 = arith.maximumf %32, %34 : vector<2x128xf32>
    %36 = vector.extract_strided_slice %4 {offsets = [10, 0, 0], sizes = [1, 2, 128], strides = [1, 1, 1]} : vector<11x2x128xf32> to vector<1x2x128xf32>
    %37 = vector.shape_cast %36 : vector<1x2x128xf32> to vector<2x128xf32>
    %38 = arith.maximumf %35, %37 : vector<2x128xf32>
    %cst = arith.constant 0.000000e+00 : f32
    %39 = vector.broadcast %cst : f32 to vector<2x128xf32>
    %cst_8 = arith.constant 0.000000e+00 : f32
    %40 = vector.broadcast %cst_8 : f32 to vector<2x128xf32>
    %41 = vector.extract_strided_slice %4 {offsets = [0, 0, 0], sizes = [1, 2, 128], strides = [1, 1, 1]} : vector<11x2x128xf32> to vector<1x2x128xf32>
    %42 = vector.shape_cast %41 : vector<1x2x128xf32> to vector<2x128xf32>
    %43 = arith.subf %42, %38 : vector<2x128xf32>
    %44 = math.exp %43 : vector<2x128xf32>
    %45 = arith.addf %39, %44 : vector<2x128xf32>
    %c0_i32_9 = arith.constant 0 : i32
    %46 = vector.broadcast %c0_i32_9 : i32 to vector<2x128xi32>
    %47 = arith.cmpi eq, %6, %46 : vector<2x128xi32>
    %48 = arith.select %47, %43, %40 : vector<2x128xi1>, vector<2x128xf32>
    %49 = vector.extract_strided_slice %4 {offsets = [1, 0, 0], sizes = [1, 2, 128], strides = [1, 1, 1]} : vector<11x2x128xf32> to vector<1x2x128xf32>
    %50 = vector.shape_cast %49 : vector<1x2x128xf32> to vector<2x128xf32>
    %51 = arith.subf %50, %38 : vector<2x128xf32>
    %52 = math.exp %51 : vector<2x128xf32>
    %53 = arith.addf %45, %52 : vector<2x128xf32>
    %c1_i32 = arith.constant 1 : i32
    %54 = vector.broadcast %c1_i32 : i32 to vector<2x128xi32>
    %55 = arith.cmpi eq, %6, %54 : vector<2x128xi32>
    %56 = arith.select %55, %51, %48 : vector<2x128xi1>, vector<2x128xf32>
    %57 = vector.extract_strided_slice %4 {offsets = [2, 0, 0], sizes = [1, 2, 128], strides = [1, 1, 1]} : vector<11x2x128xf32> to vector<1x2x128xf32>
    %58 = vector.shape_cast %57 : vector<1x2x128xf32> to vector<2x128xf32>
    %59 = arith.subf %58, %38 : vector<2x128xf32>
    %60 = math.exp %59 : vector<2x128xf32>
    %61 = arith.addf %53, %60 : vector<2x128xf32>
    %c2_i32 = arith.constant 2 : i32
    %62 = vector.broadcast %c2_i32 : i32 to vector<2x128xi32>
    %63 = arith.cmpi eq, %6, %62 : vector<2x128xi32>
    %64 = arith.select %63, %59, %56 : vector<2x128xi1>, vector<2x128xf32>
    %65 = vector.extract_strided_slice %4 {offsets = [3, 0, 0], sizes = [1, 2, 128], strides = [1, 1, 1]} : vector<11x2x128xf32> to vector<1x2x128xf32>
    %66 = vector.shape_cast %65 : vector<1x2x128xf32> to vector<2x128xf32>
    %67 = arith.subf %66, %38 : vector<2x128xf32>
    %68 = math.exp %67 : vector<2x128xf32>
    %69 = arith.addf %61, %68 : vector<2x128xf32>
    %c3_i32 = arith.constant 3 : i32
    %70 = vector.broadcast %c3_i32 : i32 to vector<2x128xi32>
    %71 = arith.cmpi eq, %6, %70 : vector<2x128xi32>
    %72 = arith.select %71, %67, %64 : vector<2x128xi1>, vector<2x128xf32>
    %73 = vector.extract_strided_slice %4 {offsets = [4, 0, 0], sizes = [1, 2, 128], strides = [1, 1, 1]} : vector<11x2x128xf32> to vector<1x2x128xf32>
    %74 = vector.shape_cast %73 : vector<1x2x128xf32> to vector<2x128xf32>
    %75 = arith.subf %74, %38 : vector<2x128xf32>
    %76 = math.exp %75 : vector<2x128xf32>
    %77 = arith.addf %69, %76 : vector<2x128xf32>
    %c4_i32 = arith.constant 4 : i32
    %78 = vector.broadcast %c4_i32 : i32 to vector<2x128xi32>
    %79 = arith.cmpi eq, %6, %78 : vector<2x128xi32>
    %80 = arith.select %79, %75, %72 : vector<2x128xi1>, vector<2x128xf32>
    %81 = vector.extract_strided_slice %4 {offsets = [5, 0, 0], sizes = [1, 2, 128], strides = [1, 1, 1]} : vector<11x2x128xf32> to vector<1x2x128xf32>
    %82 = vector.shape_cast %81 : vector<1x2x128xf32> to vector<2x128xf32>
    %83 = arith.subf %82, %38 : vector<2x128xf32>
    %84 = math.exp %83 : vector<2x128xf32>
    %85 = arith.addf %77, %84 : vector<2x128xf32>
    %c5_i32 = arith.constant 5 : i32
    %86 = vector.broadcast %c5_i32 : i32 to vector<2x128xi32>
    %87 = arith.cmpi eq, %6, %86 : vector<2x128xi32>
    %88 = arith.select %87, %83, %80 : vector<2x128xi1>, vector<2x128xf32>
    %89 = vector.extract_strided_slice %4 {offsets = [6, 0, 0], sizes = [1, 2, 128], strides = [1, 1, 1]} : vector<11x2x128xf32> to vector<1x2x128xf32>
    %90 = vector.shape_cast %89 : vector<1x2x128xf32> to vector<2x128xf32>
    %91 = arith.subf %90, %38 : vector<2x128xf32>
    %92 = math.exp %91 : vector<2x128xf32>
    %93 = arith.addf %85, %92 : vector<2x128xf32>
    %c6_i32 = arith.constant 6 : i32
    %94 = vector.broadcast %c6_i32 : i32 to vector<2x128xi32>
    %95 = arith.cmpi eq, %6, %94 : vector<2x128xi32>
    %96 = arith.select %95, %91, %88 : vector<2x128xi1>, vector<2x128xf32>
    %97 = vector.extract_strided_slice %4 {offsets = [7, 0, 0], sizes = [1, 2, 128], strides = [1, 1, 1]} : vector<11x2x128xf32> to vector<1x2x128xf32>
    %98 = vector.shape_cast %97 : vector<1x2x128xf32> to vector<2x128xf32>
    %99 = arith.subf %98, %38 : vector<2x128xf32>
    %100 = math.exp %99 : vector<2x128xf32>
    %101 = arith.addf %93, %100 : vector<2x128xf32>
    %c7_i32 = arith.constant 7 : i32
    %102 = vector.broadcast %c7_i32 : i32 to vector<2x128xi32>
    %103 = arith.cmpi eq, %6, %102 : vector<2x128xi32>
    %104 = arith.select %103, %99, %96 : vector<2x128xi1>, vector<2x128xf32>
    %105 = vector.extract_strided_slice %4 {offsets = [8, 0, 0], sizes = [1, 2, 128], strides = [1, 1, 1]} : vector<11x2x128xf32> to vector<1x2x128xf32>
    %106 = vector.shape_cast %105 : vector<1x2x128xf32> to vector<2x128xf32>
    %107 = arith.subf %106, %38 : vector<2x128xf32>
    %108 = math.exp %107 : vector<2x128xf32>
    %109 = arith.addf %101, %108 : vector<2x128xf32>
    %c8_i32 = arith.constant 8 : i32
    %110 = vector.broadcast %c8_i32 : i32 to vector<2x128xi32>
    %111 = arith.cmpi eq, %6, %110 : vector<2x128xi32>
    %112 = arith.select %111, %107, %104 : vector<2x128xi1>, vector<2x128xf32>
    %113 = vector.extract_strided_slice %4 {offsets = [9, 0, 0], sizes = [1, 2, 128], strides = [1, 1, 1]} : vector<11x2x128xf32> to vector<1x2x128xf32>
    %114 = vector.shape_cast %113 : vector<1x2x128xf32> to vector<2x128xf32>
    %115 = arith.subf %114, %38 : vector<2x128xf32>
    %116 = math.exp %115 : vector<2x128xf32>
    %117 = arith.addf %109, %116 : vector<2x128xf32>
    %c9_i32 = arith.constant 9 : i32
    %118 = vector.broadcast %c9_i32 : i32 to vector<2x128xi32>
    %119 = arith.cmpi eq, %6, %118 : vector<2x128xi32>
    %120 = arith.select %119, %115, %112 : vector<2x128xi1>, vector<2x128xf32>
    %121 = vector.extract_strided_slice %4 {offsets = [10, 0, 0], sizes = [1, 2, 128], strides = [1, 1, 1]} : vector<11x2x128xf32> to vector<1x2x128xf32>
    %122 = vector.shape_cast %121 : vector<1x2x128xf32> to vector<2x128xf32>
    %123 = arith.subf %122, %38 : vector<2x128xf32>
    %124 = math.exp %123 : vector<2x128xf32>
    %125 = arith.addf %117, %124 : vector<2x128xf32>
    %126 = math.log %125 : vector<2x128xf32>
    %127 = arith.subf %126, %120 : vector<2x128xf32>
    %c10_i32 = arith.constant 10 : i32
    %128 = vector.broadcast %c10_i32 : i32 to vector<2x128xi32>
    %129 = arith.cmpi eq, %6, %128 : vector<2x128xi32>
    %cst_10 = arith.constant 0.000000e+00 : f32
    %130 = vector.broadcast %cst_10 : f32 to vector<2x128xf32>
    %131 = arith.select %129, %130, %127 : vector<2x128xi1>, vector<2x128xf32>
    %cst_11 = arith.constant 0.000000e+00 : f32
    %132 = vector.broadcast %cst_11 : f32 to vector<2x128xf32>
    %133 = arith.subf %132, %131 : vector<2x128xf32>
    %134 = math.exp %133 : vector<2x128xf32>
    %cst_12 = arith.constant 1.000000e+00 : f32
    %135 = vector.broadcast %cst_12 : f32 to vector<2x128xf32>
    %136 = arith.subf %135, %134 : vector<2x128xf32>
    %c0_13 = arith.constant 0 : index
    %c0_14 = arith.constant 0 : index
    %137 = vector.load %arg6[%c0_13, %c0_14] : memref<2x128xf32, #tpu.memory_space<vmem>>, vector<2x128xf32>
    %138 = arith.mulf %136, %131 : vector<2x128xf32>
    %139 = arith.addf %137, %138 : vector<2x128xf32>
    %c0_15 = arith.constant 0 : index
    %c0_16 = arith.constant 0 : index
    %140 = vector.load %arg6[%c0_15, %c0_16] : memref<2x128xf32, #tpu.memory_space<vmem>>, vector<2x128xf32>
    tpu.vector_store %arg6[%c0_15, %c0_16], %139 {strides = array<i32>} : memref<2x128xf32, #tpu.memory_space<vmem>>, vector<2x128xf32>,
    %c0_i32_17 = arith.constant 0 : i32
    %141 = arith.cmpi eq, %arg2, %c0_i32_17 : i32
    %142 = arith.extui %141 : i1 to i32
    %c0_i32_18 = arith.constant 0 : i32
    %143 = arith.cmpi ne, %142, %c0_i32_18 : i32
    scf.if %143 {
      %c0_19 = arith.constant 0 : index
      %c0_20 = arith.constant 0 : index
      %144 = vector.load %arg6[%c0_19, %c0_20] : memref<2x128xf32, #tpu.memory_space<vmem>>, vector<2x128xf32>
      %145 = vector.shape_cast %144 : vector<2x128xf32> to vector<1x2x128xf32>
      %cst_21 = arith.constant dense<0.000000e+00> : vector<1xf32>
      %146 = vector.multi_reduction <add>, %145, %cst_21 [1, 2] : vector<1x2x128xf32> to vector<1xf32>
      %147 = vector.shape_cast %146 : vector<1xf32> to vector<1x1x1xf32>
      %148 = vector.extract %147[0, 0, 0] : f32 from vector<1x1x1xf32>
      %149 = vector.broadcast %148 : f32 to vector<1x1x1x1xf32>
      %c0_22 = arith.constant 0 : index
      %c0_23 = arith.constant 0 : index
      %c0_24 = arith.constant 0 : index
      %c0_25 = arith.constant 0 : index
      %150 = vector.load %arg5[%c0_22, %c0_23, %c0_24, %c0_25] : memref<1x1x1x1xf32, #tpu.memory_space<vmem>>, vector<1x1x1x1xf32>
      tpu.vector_store %arg5[%c0_22, %c0_23, %c0_24, %c0_25], %149 {strides = array<i32>} : memref<1x1x1x1xf32, #tpu.memory_space<vmem>>, vector<1x1x1x1xf32>,
    } else {
    }
    return
  }
  func.func @transform_0(%arg0: i32, %arg1: i32, %arg2: i32) -> (i32, i32, i32, i32) {
    %c1_i32 = arith.constant 1 : i32
    %0 = arith.muli %arg0, %c1_i32 : i32
    %1 = arith.addi %0, %arg2 : i32
    %c0_i32 = arith.constant 0 : i32
    %c0_i32_0 = arith.constant 0 : i32
    %c0_i32_1 = arith.constant 0 : i32
    return %arg1, %c0_i32, %1, %c0_i32_0 : i32, i32, i32, i32
  }
  func.func @transform_1(%arg0: i32, %arg1: i32, %arg2: i32) -> (i32, i32, i32, i32) {
    %c1_i32 = arith.constant 1 : i32
    %0 = arith.muli %arg0, %c1_i32 : i32
    %1 = arith.addi %0, %arg2 : i32
    %c0_i32 = arith.constant 0 : i32
    %c0_i32_0 = arith.constant 0 : i32
    %c0_i32_1 = arith.constant 0 : i32
    return %arg1, %c0_i32, %1, %c0_i32_0 : i32, i32, i32, i32
  }
  func.func @transform_2(%arg0: i32, %arg1: i32, %arg2: i32) -> (i32, i32, i32, i32) {
    %c0_i32 = arith.constant 0 : i32
    %c0_i32_0 = arith.constant 0 : i32
    %c0_i32_1 = arith.constant 0 : i32
    return %arg0, %arg1, %c0_i32, %c0_i32_0 : i32, i32, i32, i32
  }
}

</mosaic_0001>

<llo_original>
// kernel: tpu_custom_call.1
$region0: #{tpu_custom_call.1}
  #allocation0 [shape = 'u32[]', space=smem, size = 0x4, offset = 0x4, fixed_abs, tag = 'smem constant byte address 0x4 - core index']
  #allocation1 [shape = 'u32[72,128]{1,0:T(1,128)}', space=vmem, size = 0x9000, scoped, tag = 'internal scratch']
  #allocation2 [shape = 'f32[2,128]{1,0:T(2,128)}', space=vmem, size = 0x400, scoped, tag = 'scratch operand']
  %s0 = inlined_call_operand.hbm [shape: f32[2,11,2,128], index: 0, kind: input, shape index: {}]
  %s1 = inlined_call_operand.hbm [shape: s32[2,1,2,128], index: 1, kind: input, shape index: {}]
  %s2 = inlined_call_operand.vmem [shape: f32[1,2,1,1], index: 2, kind: output, shape index: {}]
  %s3 = sld [smem:[#allocation0]]
  $region57: #{tpu_custom_call.1} parent=0
    _
  %s5 = ssub.s32 1, %s3
  %s6 = scalar_select 0, %s5, %s3
  $region1: #{tpu_custom_call.1} parent=0
    #allocation3 [shape = 'u8[22528]{0}', space=vmem, size = 0x5800, scoped, tag = 'input window, operand 0']
    #allocation4 [shape = 's32[2]{0}', space=sflag, size = 0x8, scoped, tag = 'scoped memory for tpu_custom_call.1']
    #allocation5 [shape = 'u8[2048]{0}', space=vmem, size = 0x800, scoped, tag = 'input window, operand 1']
    #allocation6 [shape = 's32[2]{0}', space=sflag, size = 0x8, scoped, tag = 'scoped memory for tpu_custom_call.1']
    %7 = vsyncpa [#allocation4], 0
    %s8 = scalar_lea.sflag [#allocation4], 1
    %9 = vsyncpa %s8, 0
    %10 = vsyncpa [#allocation6], 0
    %s11 = scalar_lea.sflag [#allocation6], 1
    %12 = vsyncpa %s11, 0
    loop: start=0, step=1, limit=4
    $region2: #{tpu_custom_call.1} parent=1 // loop_pre_header
      _
    $region3: #{tpu_custom_call.1} parent=1 // loop_header
      %s14 = sphi 0, %s18
      %p15 = scmp.ge.s32.totalorder %s14, 4
      %s21 = sphi 0, %s40
      %s22 = sphi 0, %s36
      %s23 = sphi 0, %s32
      %s24 = sphi 0, %s21
      %s25 = sphi 0, %s22
      %s26 = sphi 0, %s23
      %s27 = sphi 0, %s24
      %s28 = sphi 0, %s25
      %s29 = sphi 0, %s26
      %s47 = sphi 0, %s49
      %s50 = sphi 0, %s47
      %s51 = sphi 0, %s50
      %s67 = sphi 0, %s51
      %s77 = sphi 0, %s79
      %s80 = sphi 0, %s77
      %s81 = sphi 0, %s80
      %s97 = sphi 0, %s81
      %s105 = sphi 0, %s107
      %s108 = sphi 0, %s105
      %s109 = sphi 0, %s108
      %s125 = sphi 0, %s109
    $region4: #{tpu_custom_call.1} parent=1 // loop_header_branch
      %17 = sbr.rel (%p15) target = $region8
    $region5: #{tpu_custom_call.1} parent=1 // loop_body
      %s19 = ssub.s32 %s14, 1
      %s20 = ssub.s32 %s14, 2
      %s30 = sadd.s32 1, %s23
      %p31 = scmp.ge.s32.totalorder %s30, 1
      %s32 = scalar_select %p31, 0, %s30
      %s33 = sadd.s32 1, %s22
      %s34 = scalar_select %p31, %s33, %s22
      %p35 = scmp.ge.s32.totalorder %s34, 2
      %s36 = scalar_select %p35, 0, %s34
      %s37 = sadd.s32 1, %s21
      %s38 = scalar_select %p35, %s37, %s21
      %p39 = scmp.ge.s32.totalorder %s38, 1
      %s40 = scalar_select %p39, 0, %s38
      %s41 = sadd.s32 %s21, %s23
      %s42 = sadd.s32 %s40, %s32
      %s43 = ssub.s32 %s22, %s36
      %s44 = ssub.s32 %s41, %s42
      %s45 = sor.u32 %s43, %s44
      %p46 = scmp.eq.s32.totalorder %s45, 0
      %s48 = sadd.s32 %s47, 1
      %s49 = scalar_select %p46, %s47, %s48
      %p52 = pneg %p46
      %p53 = scmp.eq.s32.totalorder %s14, 1
      %p54 = por %p52, %p53
      %p55 = scmp.ne.s32.totalorder %s47, %s50
      %p56 = scmp.eq.s32.totalorder %s14, 0
      %p57 = por %p55, %p56
      %p58 = scmp.ne.s32.totalorder %s47, %s50
      %p59 = scmp.eq.s32.totalorder %s19, 1
      %p60 = por %p58, %p59
      %p61 = scmp.ne.s32.totalorder %s50, %s51
      %p62 = scmp.eq.s32.totalorder %s19, 0
      %p63 = por %p61, %p62
      %p64 = scmp.ne.s32.totalorder %s50, %s51
      %p65 = scmp.eq.s32.totalorder %s20, 1
      %p66 = por %p64, %p65
      %p68 = scmp.ne.s32.totalorder %s51, %s67
      %p69 = scmp.eq.s32.totalorder %s20, 0
      %p70 = por %p68, %p69
      %s71 = sadd.s32 %s21, %s23
      %s72 = sadd.s32 %s40, %s32
      %s73 = ssub.s32 %s22, %s36
      %s74 = ssub.s32 %s71, %s72
      %s75 = sor.u32 %s73, %s74
      %p76 = scmp.eq.s32.totalorder %s75, 0
      %s78 = sadd.s32 %s77, 1
      %s79 = scalar_select %p76, %s77, %s78
      %p82 = pneg %p76
      %p83 = scmp.eq.s32.totalorder %s14, 1
      %p84 = por %p82, %p83
      %p85 = scmp.ne.s32.totalorder %s77, %s80
      %p86 = scmp.eq.s32.totalorder %s14, 0
      %p87 = por %p85, %p86
      %p88 = scmp.ne.s32.totalorder %s77, %s80
      %p89 = scmp.eq.s32.totalorder %s19, 1
      %p90 = por %p88, %p89
      %p91 = scmp.ne.s32.totalorder %s80, %s81
      %p92 = scmp.eq.s32.totalorder %s19, 0
      %p93 = por %p91, %p92
      %p94 = scmp.ne.s32.totalorder %s80, %s81
      %p95 = scmp.eq.s32.totalorder %s20, 1
      %p96 = por %p94, %p95
      %p98 = scmp.ne.s32.totalorder %s81, %s97
      %p99 = scmp.eq.s32.totalorder %s20, 0
      %p100 = por %p98, %p99
      %s101 = ssub.s32 %s21, %s40
      %s102 = ssub.s32 %s22, %s36
      %s103 = sor.u32 %s101, %s102
      %p104 = scmp.eq.s32.totalorder %s103, 0
      %s106 = sadd.s32 %s105, 1
      %s107 = scalar_select %p104, %s105, %s106
      %p110 = pneg %p104
      %p111 = scmp.eq.s32.totalorder %s14, 1
      %p112 = por %p110, %p111
      %p113 = scmp.ne.s32.totalorder %s105, %s108
      %p114 = scmp.eq.s32.totalorder %s14, 0
      %p115 = por %p113, %p114
      %p116 = scmp.ne.s32.totalorder %s105, %s108
      %p117 = scmp.eq.s32.totalorder %s19, 1
      %p118 = por %p116, %p117
      %p119 = scmp.ne.s32.totalorder %s108, %s109
      %p120 = scmp.eq.s32.totalorder %s19, 0
      %p121 = por %p119, %p120
      %p122 = scmp.ne.s32.totalorder %s108, %s109
      %p123 = scmp.eq.s32.totalorder %s20, 1
      %p124 = por %p122, %p123
      %p126 = scmp.ne.s32.totalorder %s109, %s125
      %p127 = scmp.eq.s32.totalorder %s20, 0
      %p128 = por %p126, %p127
      %p129 = scmp.le.s32.totalorder 1, %s14
      %p130 = scmp.lt.s32.totalorder %s14, 3
      %p131 = pnand %p129, %p130
      %p132 = pneg %p131
      // Predicated region
      $region9: #{tpu_custom_call.1} parent=5 // pred_check
        _
      $region10: #{tpu_custom_call.1} parent=5 // pred_check_branch
        %134 = sbr.rel (%p131) target = $region12
      $region11: #{tpu_custom_call.1} parent=5 // pred_region
        %s135 = ssub.s32 %s14, 1
      $region12: #{tpu_custom_call.1} parent=5 // pred_fallthru
        _
      %p136 = scmp.lt.s32.totalorder %s14, 2
      // Predicated region
      $region13: #{tpu_custom_call.1} parent=5 // pred_check
        %p137 = pneg %p136
      $region14: #{tpu_custom_call.1} parent=5 // pred_check_branch
        %139 = sbr.rel (%p137) target = $region16
      $region15: #{tpu_custom_call.1} parent=5 // pred_region
        // Predicated region
        $region17: #{tpu_custom_call.1} parent=15 // pred_check
          %p140 = pneg %p57
        $region18: #{tpu_custom_call.1} parent=15 // pred_check_branch
          %142 = sbr.rel (%p140) target = $region20
        $region19: #{tpu_custom_call.1} parent=15 // pred_region
          %s143 = sand.u32 %s47, 1
          %s144 = scalar_lea.sflag [#allocation4], %s143
          %s145 = sand.u32 %s47, 1
          %s146 = smul.addr %s145, 22
          %s147 = scalar_lea.vmem [#allocation3], %s146
          %s148 = sadd.s32 %s21, %s23
          %150 = vsyncadd %s144, 0
          %s151 = smul.addr %s22, 11
          %s152 = sadd.s32 %s148, %s151
          %s153 = smul.addr %s152, 2
          %s154 = scalar_lea.hbm %s0, %s153
          %s155 = sshll.u32 %s154, 4
          %s156 = int_to_ptr.hbm [resolvable:$true] %s155
          %s157 = sshll.u32 %s147, 4
          %s158 = int_to_ptr.vmem [resolvable:$true] %s157
          %163 = dma.hbm_to_vmem [thread:$0]  %s156, 352, %s158, %s144, 32, 32, 2
        $region20: #{tpu_custom_call.1} parent=15 // pred_fallthru
          _
        // Predicated region
        $region21: #{tpu_custom_call.1} parent=15 // pred_check
          %p164 = pneg %p87
        $region22: #{tpu_custom_call.1} parent=15 // pred_check_branch
          %166 = sbr.rel (%p164) target = $region24
        $region23: #{tpu_custom_call.1} parent=15 // pred_region
          %s167 = sand.u32 %s77, 1
          %s168 = scalar_lea.sflag [#allocation6], %s167
          %s169 = sand.u32 %s77, 1
          %s170 = smul.addr %s169, 2
          %s171 = scalar_lea.vmem [#allocation5], %s170
          %s172 = sadd.s32 %s21, %s23
          %174 = vsyncadd %s168, 0
          %s175 = sadd.s32 %s172, %s22
          %s176 = smul.addr %s175, 2
          %s177 = scalar_lea.hbm %s1, %s176
          %s179 = sshll.u32 %s177, 4
          %s180 = int_to_ptr.hbm [resolvable:$true] %s179
          %s181 = sshll.u32 %s171, 4
          %s182 = int_to_ptr.vmem [resolvable:$true] %s181
          %184 = dma.hbm_to_vmem [thread:$0]  %s180, 32, %s182, %s168
        $region24: #{tpu_custom_call.1} parent=15 // pred_fallthru
          _
      $region16: #{tpu_custom_call.1} parent=5 // pred_fallthru
        _
      %p185 = scmp.le.s32.totalorder 1, %s14
      %p186 = scmp.lt.s32.totalorder %s14, 3
      %p187 = pnand %p185, %p186
      %p188 = pneg %p187
      // Predicated region
      $region25: #{tpu_custom_call.1} parent=5 // pred_check
        _
      $region26: #{tpu_custom_call.1} parent=5 // pred_check_branch
        %190 = sbr.rel (%p187) target = $region28
      $region27: #{tpu_custom_call.1} parent=5 // pred_region
        %s191 = ssub.s32 %s14, 1
        %s192 = sand.u32 %s50, 1
        %s193 = scalar_lea.sflag [#allocation4], %s192
        %s194 = sand.u32 %s50, 1
        %s195 = smul.addr %s194, 22
        %s196 = scalar_lea.vmem [#allocation3], %s195
        // Predicated region
        $region29: #{tpu_custom_call.1} parent=27 // pred_check
          %p197 = pneg %p63
        $region30: #{tpu_custom_call.1} parent=27 // pred_check_branch
          %199 = sbr.rel (%p197) target = $region32
        $region31: #{tpu_custom_call.1} parent=27 // pred_region
          %201 = dma.done %s193, 352
        $region32: #{tpu_custom_call.1} parent=27 // pred_fallthru
          _
        %s202 = sand.u32 %s80, 1
        %s203 = scalar_lea.sflag [#allocation6], %s202
        %s204 = sand.u32 %s80, 1
        %s205 = smul.addr %s204, 2
        %s206 = scalar_lea.vmem [#allocation5], %s205
        // Predicated region
        $region33: #{tpu_custom_call.1} parent=27 // pred_check
          %p207 = pneg %p93
        $region34: #{tpu_custom_call.1} parent=27 // pred_check_branch
          %209 = sbr.rel (%p207) target = $region36
        $region35: #{tpu_custom_call.1} parent=27 // pred_region
          %211 = dma.done %s203, 32
        $region36: #{tpu_custom_call.1} parent=27 // pred_fallthru
          _
        %s212 = sand.u32 %s50, 1
        %s213 = scalar_lea.sflag [#allocation4], %s212
        %s214 = sand.u32 %s50, 1
        %s215 = smul.addr %s214, 22
        %s216 = scalar_lea.vmem [#allocation3], %s215
        %p217 = pneg %p63
        %p218 = pneg %p60
        %s219 = sand.u32 %s80, 1
        %s220 = scalar_lea.sflag [#allocation6], %s219
        %s221 = sand.u32 %s80, 1
        %s222 = smul.addr %s221, 2
        %s223 = scalar_lea.vmem [#allocation5], %s222
        %p224 = pneg %p93
        %p225 = pneg %p90
        %p226 = pneg %p121
        %p227 = pneg %p118
        %p228 = scmp.lt.s32.totalorder %s24, 0
        %s229 = scalar_select %p228, %s24, 0
        %p230 = scmp.lt.s32.totalorder %s25, 1
        %s231 = scalar_select %p230, %s25, 1
        %s232 = smul.addr %s229, 2
        %s233 = sadd.s32 %s231, %s232
        %s234 = scalar_lea.vmem %s2, %s233
        %s235 = sadd.s32 %s24, %s26
        %s236 = sadd.s32 %s24, %s26
        %p237 = scmp.lt.s32.totalorder %s24, 0
        %s238 = scalar_select %p237, %s24, 0
        %p239 = scmp.lt.s32.totalorder %s25, 1
        %s240 = scalar_select %p239, %s25, 1
        %s241 = smul.addr %s238, 2
        %s242 = sadd.s32 %s240, %s241
        %s243 = scalar_lea.vmem %s2, %s242
        %p244 = scmp.eq.s32.totalorder %s26, 0
        // Predicated region
        $region37: #{tpu_custom_call.1} parent=27 // pred_check
          %p245 = pneg %p244
        $region38: #{tpu_custom_call.1} parent=27 // pred_check_branch
          %247 = sbr.rel (%p245) target = $region40
        $region39: #{tpu_custom_call.1} parent=27 // pred_region
          %248 = vst [vmem:[#allocation2] sm:$0x3] 0.0
        $region40: #{tpu_custom_call.1} parent=27 // pred_fallthru
          _
        %v249 = vld [vmem:[%s196] sm:$0x3]
        %v250 = vld [vmem:[%s196 + $0x2] sm:$0x3]
        %v251 = vld [vmem:[%s196 + $0x4] sm:$0x3]
        %v252 = vld [vmem:[%s196 + $0x6] sm:$0x3]
        %v253 = vld [vmem:[%s196 + $0x8] sm:$0x3]
        %v254 = vld [vmem:[%s196 + $0xa] sm:$0x3]
        %v255 = vld [vmem:[%s196 + $0xc] sm:$0x3]
        %v256 = vld [vmem:[%s196 + $0xe] sm:$0x3]
        %v257 = vld [vmem:[%s196 + $0x10] sm:$0x3]
        %v258 = vld [vmem:[%s196 + $0x12] sm:$0x3]
        %v259 = vld [vmem:[%s196 + $0x14] sm:$0x3]
        %v260 = vld [vmem:[%s206] sm:$0x3]
        %v261 = vmax.f32 %v249, %v250
        %v262 = vmax.f32 %v261, %v251
        %v263 = vmax.f32 %v262, %v252
        %v264 = vmax.f32 %v263, %v253
        %v265 = vmax.f32 %v264, %v254
        %v266 = vmax.f32 %v265, %v255
        %v267 = vmax.f32 %v266, %v256
        %v268 = vmax.f32 %v267, %v257
        %v269 = vmax.f32 %v268, %v258
        %v270 = vmax.f32 %v269, %v259
        %v271 = vsub.f32 %v249, %v270
        %v272 = vmul.f32 %v271, 1.442695
        %v273 = vpow.pop %v272
        %v274 = vadd.f32 %v273, 0.0
        %vm275 = vcmp.eq.s32.totalorder %v260, 0
        %v276 = vsel %vm275, %v271, 0.0
        %v277 = vsub.f32 %v250, %v270
        %v278 = vmul.f32 %v277, 1.442695
        %v279 = vpow.pop %v278
        %v280 = vadd.f32 %v274, %v279
        %vm281 = vcmp.eq.s32.totalorder %v260, 1
        %v282 = vsel %vm281, %v277, %v276
        %v283 = vsub.f32 %v251, %v270
        %v284 = vmul.f32 %v283, 1.442695
        %v285 = vpow.pop %v284
        %v286 = vadd.f32 %v280, %v285
        %vm287 = vcmp.eq.s32.totalorder %v260, 2
        %v288 = vsel %vm287, %v283, %v282
        %v289 = vsub.f32 %v252, %v270
        %v290 = vmul.f32 %v289, 1.442695
        %v291 = vpow.pop %v290
        %v292 = vadd.f32 %v286, %v291
        %vm293 = vcmp.eq.s32.totalorder %v260, 3
        %v294 = vsel %vm293, %v289, %v288
        %v295 = vsub.f32 %v253, %v270
        %v296 = vmul.f32 %v295, 1.442695
        %v297 = vpow.pop %v296
        %v298 = vadd.f32 %v292, %v297
        %vm299 = vcmp.eq.s32.totalorder %v260, 4
        %v300 = vsel %vm299, %v295, %v294
        %v301 = vsub.f32 %v254, %v270
        %v302 = vmul.f32 %v301, 1.442695
        %v303 = vpow.pop %v302
        %v304 = vadd.f32 %v298, %v303
        %vm305 = vcmp.eq.s32.totalorder %v260, 5
        %v306 = vsel %vm305, %v301, %v300
        %v307 = vsub.f32 %v255, %v270
        %v308 = vmul.f32 %v307, 1.442695
        %v309 = vpow.pop %v308
        %v310 = vadd.f32 %v304, %v309
        %vm311 = vcmp.eq.s32.totalorder %v260, 6
        %v312 = vsel %vm311, %v307, %v306
        %v313 = vsub.f32 %v256, %v270
        %v314 = vmul.f32 %v313, 1.442695
        %v315 = vpow.pop %v314
        %v316 = vadd.f32 %v310, %v315
        %vm317 = vcmp.eq.s32.totalorder %v260, 7
        %v318 = vsel %vm317, %v313, %v312
        %v319 = vsub.f32 %v257, %v270
        %v320 = vmul.f32 %v319, 1.442695
        %v321 = vpow.pop %v320
        %v322 = vadd.f32 %v316, %v321
        %vm323 = vcmp.eq.s32.totalorder %v260, 8
        %v324 = vsel %vm323, %v319, %v318
        %v325 = vsub.f32 %v258, %v270
        %v326 = vmul.f32 %v325, 1.442695
        %v327 = vpow.pop %v326
        %v328 = vadd.f32 %v322, %v327
        %vm329 = vcmp.eq.s32.totalorder %v260, 9
        %v330 = vsel %vm329, %v325, %v324
        %v331 = vsub.f32 %v259, %v270
        %v332 = vmul.f32 %v331, 1.442695
        %v333 = vpow.pop %v332
        %v334 = vadd.f32 %v328, %v333
        %v335 = vlog2.pop %v334
        %v336 = vmul.f32 %v335, 0.6931472
        %v337 = vsub.f32 %v336, %v330
        %vm338 = vcmp.eq.s32.totalorder %v260, 10
        %v339 = vsel %vm338, 0.0, %v337
        %v340 = vsub.f32 0.0, %v339
        %v341 = vmul.f32 %v340, 1.442695
        %v342 = vpow.pop %v341
        %v343 = vsub.f32 1.0, %v342
        %v344 = vld [vmem:[#allocation2] sm:$0x3]
        %v345 = vmul.f32 %v343, %v339
        %v346 = vadd.f32 %v344, %v345
        %347 = vst [vmem:[#allocation2] sm:$0x3] %v346
        // Predicated region
        $region41: #{tpu_custom_call.1} parent=27 // pred_check
          %p348 = pneg %p244
        $region42: #{tpu_custom_call.1} parent=27 // pred_check_branch
          %350 = sbr.rel (%p348) target = $region44
        $region43: #{tpu_custom_call.1} parent=27 // pred_region
          %v351 = vld [vmem:[#allocation2] sm:$0x3]
          %vm352 = vcmask 1041408
          %v353 = vsel %vm352, %v351, 0.0
          %354 = vadd.xlane.f32.xlu0 %v353
          %v355 = vpop.xlane.xlu0 %354
          %v356 = vrot.slane %v355, 4
          %v357 = vadd.f32 %v355, %v356
          %v358 = vrot.slane %v357, 2
          %v359 = vadd.f32 %v357, %v358
          %v360 = vrot.slane %v359, 1
          %v361 = vadd.f32 %v359, %v360
          %s362 = vtos %v361
          %v363 = vstv %s362
          %vm364 = vcmask 0
          %365 = vst.msk [vmem:[%s243] sm:$0x1] %vm364, %v363
        $region44: #{tpu_custom_call.1} parent=27 // pred_fallthru
          _
        %p366 = scmp.lt.s32.totalorder %s24, 0
        %s367 = scalar_select %p366, %s24, 0
        %p368 = scmp.lt.s32.totalorder %s25, 1
        %s369 = scalar_select %p368, %s25, 1
        %s370 = smul.addr %s367, 2
        %s371 = sadd.s32 %s369, %s370
        %s372 = scalar_lea.vmem %s2, %s371
        // Predicated region
        $region45: #{tpu_custom_call.1} parent=27 // pred_check
          %p373 = pneg %p118
        $region46: #{tpu_custom_call.1} parent=27 // pred_check_branch
          %375 = sbr.rel (%p373) target = $region48
        $region47: #{tpu_custom_call.1} parent=27 // pred_region
          _
        $region48: #{tpu_custom_call.1} parent=27 // pred_fallthru
          _
      $region28: #{tpu_custom_call.1} parent=5 // pred_fallthru
        _
      %p376 = scmp.le.s32.totalorder 2, %s14
      // Predicated region
      $region49: #{tpu_custom_call.1} parent=5 // pred_check
        %p377 = pneg %p376
      $region50: #{tpu_custom_call.1} parent=5 // pred_check_branch
        %379 = sbr.rel (%p377) target = $region52
      $region51: #{tpu_custom_call.1} parent=5 // pred_region
        %s380 = ssub.s32 %s14, 2
        // Predicated region
        $region53: #{tpu_custom_call.1} parent=51 // pred_check
          %p381 = pneg %p124
        $region54: #{tpu_custom_call.1} parent=51 // pred_check_branch
          %383 = sbr.rel (%p381) target = $region56
        $region55: #{tpu_custom_call.1} parent=51 // pred_region
          %p384 = scmp.lt.s32.totalorder %s27, 0
          %s385 = scalar_select %p384, %s27, 0
          %p386 = scmp.lt.s32.totalorder %s28, 1
          %s387 = scalar_select %p386, %s28, 1
          %s388 = smul.addr %s385, 2
          %s389 = sadd.s32 %s387, %s388
          %s390 = scalar_lea.vmem %s2, %s389
        $region56: #{tpu_custom_call.1} parent=51 // pred_fallthru
          _
      $region52: #{tpu_custom_call.1} parent=5 // pred_fallthru
        _
    $region6: #{tpu_custom_call.1} parent=1 // loop_footer
      %s18 = sadd.s32 1, %s14
    $region7: #{tpu_custom_call.1} parent=1 // loop_footer_branch
      %13 = sbr.rel target = $region3
    $region8: #{tpu_custom_call.1} parent=1 // loop_exit
      _
    %391 = vsyncpa [#allocation4], 1
    %s392 = scalar_lea.sflag [#allocation4], 1
    %393 = vsyncpa %s392, 1
    %394 = vsyncpa [#allocation6], 1
    %s395 = scalar_lea.sflag [#allocation6], 1
    %396 = vsyncpa %s395, 1

</llo_original>
